<compile_context>
chip_gen: v5e
topology: v5e:2x2
jax: 0.10.0
libtpu: 0.0.40
codegen_flags: <defaults>
</compile_context>

<pallas_src>
import functools

import jax
import jax.numpy as jnp
from jax.experimental import pallas as pl
from jax.experimental.pallas import tpu as pltpu


_HIDDEN1 = 256    # nn.Linear(hidden_size * 4, 256)
_OUT = 100        # nn.Linear(256, 100)
_OUT_PAD = 128    # lane-dense padded output width


def _round_up(x, m):
    return ((x + m - 1) // m) * m


def _dense_head_kernel(hs0_ref, hs1_ref, hs2_ref, hs3_ref,
                       w1_ref, b1_ref, w2_ref, b2_ref,
                       o_ref, acc_ref, *, seq_len, inv_seq_len, needs_seq_mask):
    s = pl.program_id(1)

    @pl.when(s == 0)
    def _init():
        acc_ref[...] = jnp.zeros_like(acc_ref)

    ts = hs0_ref.shape[1]
    h_dim = hs0_ref.shape[2]

    if needs_seq_mask:
        # Mask out-of-range seq rows of the (possibly ragged) last tile.
        seq_idx = jax.lax.broadcasted_iota(jnp.int32, (ts, h_dim), 0) + s * ts
        mask = (seq_idx < seq_len)[None, :, :]          # [1, TS, H]

    # Streamed: per hidden state, masked seq-sum then matmul straight into the
    # [TB, 256] accumulator (concat @ W1 == sum_i pool_i @ W1_i).
    for i, ref in enumerate((hs0_ref, hs1_ref, hs2_ref, hs3_ref)):
        x = ref[...].astype(jnp.float32)                # [TB, TS, H]
        if needs_seq_mask:
            x = jnp.where(mask, x, 0.0)
        pooled = jnp.sum(x, axis=1)                     # [TB, H]
        acc_ref[...] += jnp.dot(pooled, w1_ref[i],
                                preferred_element_type=jnp.float32)

    @pl.when(s == pl.num_programs(1) - 1)
    def _finalize():
        # mean folded into a single scale of the accumulated (sum @ W1).
        h = jnp.maximum(acc_ref[...] * inv_seq_len + b1_ref[...], 0.0)
        o = jnp.dot(h, w2_ref[...], preferred_element_type=jnp.float32)
        o_ref[...] = jnp.maximum(o + b2_ref[...], 0.0).astype(o_ref.dtype)


def transformer_dense_head(hidden_states_last4, w1, b1, w2, b2):
    """hidden_states_last4: list/tuple of 4 arrays, each [B, S, H]."""
    hs0, hs1, hs2, hs3 = hidden_states_last4
    B, S, H = hs0.shape
    assert w1.shape == (4 * H, _HIDDEN1)
    assert w2.shape == (_HIDDEN1, _OUT)

    itemsize = jnp.dtype(hs0.dtype).itemsize
    sub = {1: 32, 2: 16}.get(itemsize, 8)      # sublane multiple for the input dtype

    # ---- generation-aware VMEM budget -------------------------------------
    try:
        vmem_cap = int(pltpu.get_tpu_info().vmem_capacity_bytes)
    except Exception:
        vmem_cap = 64 * 1024 * 1024            # conservative (v7x per-core)
    total_budget = min(int(vmem_cap * 0.7), 96 * 1024 * 1024)

    weight_bytes = (4 * H * _HIDDEN1 + _HIDDEN1
                    + _HIDDEN1 * _OUT_PAD + _OUT_PAD) * 4   # f32 weights

    # ---- batch tile: keep >= 2 "parallel" blocks when B allows (v7x) ------
    if B <= 8:
        TB = _round_up(B, 8)
    else:
        TB = min(128, _round_up(-(-B // 2), 8))

    def _fixed_bytes(tb):
        return (2 * weight_bytes                 # weights (double-buffered)
                + tb * _HIDDEN1 * 4              # [TB, 256] accumulator
                + 2 * tb * _OUT_PAD * 4          # output block (double-buffered)
                + (1 << 20))                     # internal-scratch headroom

    def _ts_cap(tb):
        per_row = 4 * 2 * tb * H * itemsize      # 4 inputs, double-buffered
        avail = max(0, total_budget - _fixed_bytes(tb))
        return (avail // per_row) // sub * sub

    # Shrink TB first if even a minimal seq tile would blow the budget.
    while TB > 8 and _ts_cap(TB) < sub:
        TB = max(8, _round_up(TB // 2, 8))
    TS = max(sub, min(_ts_cap(TB), 1024))
    if TS >= S:
        TS = S                                   # full seq dim is always legal
    needs_seq_mask = (S % TS) != 0

    nb = -(-B // TB)
    ns = -(-S // TS)
    B_out = nb * TB                              # tiny padded output, sliced below

    actual_total = _fixed_bytes(TB) + 4 * 2 * TB * TS * H * itemsize
    vmem_limit = min(vmem_cap, max(actual_total + (4 << 20), 32 << 20))

    # Cheap weight plumbing (no large-tensor copies):
    w1r = w1.reshape(4, H, _HIDDEN1).astype(jnp.float32)   # W1 split per hidden state
    b1r = b1.reshape(1, _HIDDEN1).astype(jnp.float32)
    w2p = jnp.zeros((_HIDDEN1, _OUT_PAD), jnp.float32).at[:, :_OUT].set(
        w2.astype(jnp.float32))                            # zero-padded lanes
    b2p = jnp.zeros((1, _OUT_PAD), jnp.float32).at[:, :_OUT].set(
        b2.reshape(1, _OUT).astype(jnp.float32))

    hs_spec = pl.BlockSpec((TB, TS, H), lambda i, s: (i, s, 0))

    kernel = functools.partial(
        _dense_head_kernel,
        seq_len=S, inv_seq_len=1.0 / S, needs_seq_mask=needs_seq_mask)

    flops = int(2 * B_out * ns * 4 * H * _HIDDEN1      # streamed W1 matmuls
                + 2 * B_out * _HIDDEN1 * _OUT_PAD      # W2 matmul
                + 4 * B * S * H)                       # seq-sum adds
    bytes_accessed = int(4 * B * S * H * itemsize
                         + weight_bytes
                         + B_out * _OUT_PAD * 4)

    out = pl.pallas_call(
        kernel,
        out_shape=jax.ShapeDtypeStruct((B_out, _OUT_PAD), jnp.float32),
        grid_spec=pltpu.PrefetchScalarGridSpec(
            num_scalar_prefetch=0,
            grid=(nb, ns),
            in_specs=[
                hs_spec, hs_spec, hs_spec, hs_spec,
                pl.BlockSpec((4, H, _HIDDEN1), lambda i, s: (0, 0, 0)),
                pl.BlockSpec((1, _HIDDEN1), lambda i, s: (0, 0)),
                pl.BlockSpec((_HIDDEN1, _OUT_PAD), lambda i, s: (0, 0)),
                pl.BlockSpec((1, _OUT_PAD), lambda i, s: (0, 0)),
            ],
            out_specs=pl.BlockSpec((TB, _OUT_PAD), lambda i, s: (i, 0)),
            scratch_shapes=[pltpu.VMEM((TB, _HIDDEN1), jnp.float32)],
        ),
        compiler_params=pltpu.CompilerParams(
            dimension_semantics=("parallel", "arbitrary"),
            vmem_limit_bytes=int(vmem_limit)),
        cost_estimate=pl.CostEstimate(
            flops=flops, transcendentals=0, bytes_accessed=bytes_accessed),
    )(hs0, hs1, hs2, hs3, w1r, b1r, w2p, b2p)

    return out[:B, :_OUT]


def _reference(hidden_states_last4, w1, b1, w2, b2):
    x = jnp.concatenate(hidden_states_last4, axis=2)
    pooled = jnp.mean(x.astype(jnp.float32), axis=1)
    h = jnp.maximum(pooled @ w1 + b1, 0.0)
    return jnp.maximum(h @ w2 + b2, 0.0)


if __name__ == "__main__":
    # Small deterministic shapes consistent with the module's forward:
    # batch=2, seq=8, hidden=32  ->  concat feature dim = 4*32 = 128
    B, S, H = 2, 8, 32
    F = 4 * H

    key = jax.random.PRNGKey(0)
    k_hs, k_w1, k_b1, k_w2, k_b2 = jax.random.split(key, 5)

    # Synthetic "last 4 hidden states" from the (untranslatable) backbone.
    hs_keys = jax.random.split(k_hs, 4)
    hidden_states_last4 = [
        jax.random.normal(k, (B, S, H), dtype=jnp.float32) for k in hs_keys
    ]

    # MLP parameters (nn.Linear(hidden*4, 256), nn.Linear(256, 100)) stored [in, out].
    w1 = jax.random.normal(k_w1, (F, _HIDDEN1), dtype=jnp.float32) * 0.02
    b1 = jax.random.normal(k_b1, (_HIDDEN1,), dtype=jnp.float32) * 0.02
    w2 = jax.random.normal(k_w2, (_HIDDEN1, _OUT), dtype=jnp.float32) * 0.02
    b2 = jax.random.normal(k_b2, (_OUT,), dtype=jnp.float32) * 0.02

    out = transformer_dense_head(hidden_states_last4, w1, b1, w2, b2)
    out = jax.block_until_ready(out)

    ref = _reference(hidden_states_last4, w1, b1, w2, b2)
    assert out.shape == (B, _OUT), out.shape
    assert jnp.allclose(out, ref, atol=1e-4, rtol=1e-4), "mismatch vs reference"

    print("KERNEL_OK")
</pallas_src>

<mosaic_0001>
module attributes {stable_mosaic.version = 11 : i64} {
  func.func @_dense_head_kernel(%arg0: i32, %arg1: i32, %arg2: memref<8x8x32xf32, #tpu.memory_space<vmem>>, %arg3: memref<8x8x32xf32, #tpu.memory_space<vmem>>, %arg4: memref<8x8x32xf32, #tpu.memory_space<vmem>>, %arg5: memref<8x8x32xf32, #tpu.memory_space<vmem>>, %arg6: memref<4x32x256xf32, #tpu.memory_space<vmem>>, %arg7: memref<1x256xf32, #tpu.memory_space<vmem>>, %arg8: memref<256x128xf32, #tpu.memory_space<vmem>>, %arg9: memref<1x128xf32, #tpu.memory_space<vmem>>, %arg10: memref<8x128xf32, #tpu.memory_space<vmem>>, %arg11: memref<8x256xf32, #tpu.memory_space<vmem>>) attributes {dimension_semantics = [#tpu.dimension_semantics<parallel>, #tpu.dimension_semantics<arbitrary>], iteration_bounds = array<i64: 1, 1>, scalar_prefetch = 0 : i64, scratch_operands = 1 : i64, tpu.core_type = #tpu.core_type<tc>, window_params = [{transform_indices = @transform_0, window_bounds = array<i64: 8, 8, 32>}, {transform_indices = @transform_1, window_bounds = array<i64: 8, 8, 32>}, {transform_indices = @transform_2, window_bounds = array<i64: 8, 8, 32>}, {transform_indices = @transform_3, window_bounds = array<i64: 8, 8, 32>}, {pipeline_mode = #tpu.pipeline_mode<synchronous>, transform_indices = @transform_4, window_bounds = array<i64: 4, 32, 256>}, {pipeline_mode = #tpu.pipeline_mode<synchronous>, transform_indices = @transform_5, window_bounds = array<i64: 1, 256>}, {pipeline_mode = #tpu.pipeline_mode<synchronous>, transform_indices = @transform_6, window_bounds = array<i64: 256, 128>}, {pipeline_mode = #tpu.pipeline_mode<synchronous>, transform_indices = @transform_7, window_bounds = array<i64: 1, 128>}, {transform_indices = @transform_8, window_bounds = array<i64: 8, 128>}]} {
    %c0_i32 = arith.constant 0 : i32
    %0 = arith.cmpi eq, %arg1, %c0_i32 : i32
    %1 = arith.extui %0 : i1 to i32
    %c0_i32_0 = arith.constant 0 : i32
    %2 = arith.cmpi ne, %1, %c0_i32_0 : i32
    scf.if %2 {
      %cst_46 = arith.constant 0.000000e+00 : f32
      %38 = vector.broadcast %cst_46 : f32 to vector<8x256xf32>
      %c0_47 = arith.constant 0 : index
      %c0_48 = arith.constant 0 : index
      %39 = vector.load %arg11[%c0_47, %c0_48] : memref<8x256xf32, #tpu.memory_space<vmem>>, vector<8x256xf32>
      tpu.vector_store %arg11[%c0_47, %c0_48], %38 {strides = array<i32>} : memref<8x256xf32, #tpu.memory_space<vmem>>, vector<8x256xf32>,
    } else {
    }
    %c0 = arith.constant 0 : index
    %c0_1 = arith.constant 0 : index
    %c0_2 = arith.constant 0 : index
    %3 = vector.load %arg2[%c0, %c0_1, %c0_2] : memref<8x8x32xf32, #tpu.memory_space<vmem>>, vector<8x8x32xf32>
    %cst = arith.constant dense<0.000000e+00> : vector<8x32xf32>
    %4 = vector.multi_reduction <add>, %3, %cst [1] : vector<8x8x32xf32> to vector<8x32xf32>
    %c0_3 = arith.constant 0 : index
    %c0_4 = arith.constant 0 : index
    %5 = vector.load %arg11[%c0_3, %c0_4] : memref<8x256xf32, #tpu.memory_space<vmem>>, vector<8x256xf32>
    %c0_5 = arith.constant 0 : index
    %c0_6 = arith.constant 0 : index
    %c0_7 = arith.constant 0 : index
    %6 = vector.load %arg6[%c0_5, %c0_6, %c0_7] : memref<4x32x256xf32, #tpu.memory_space<vmem>>, vector<1x32x256xf32>
    %7 = vector.shape_cast %6 : vector<1x32x256xf32> to vector<32x256xf32>
    %cst_8 = arith.constant dense<0.000000e+00> : vector<8x256xf32>
    %8 = tpu.matmul %4, %7, %cst_8 {dimension_numbers = #tpu.dot_dimension_numbers<[1], [0], [0], [1], [0, 0, 1, 1], [], []>} : vector<8x32xf32>, vector<32x256xf32>, vector<8x256xf32> -> vector<8x256xf32>
    %9 = arith.addf %5, %8 : vector<8x256xf32>
    %c0_9 = arith.constant 0 : index
    %c0_10 = arith.constant 0 : index
    %10 = vector.load %arg11[%c0_9, %c0_10] : memref<8x256xf32, #tpu.memory_space<vmem>>, vector<8x256xf32>
    tpu.vector_store %arg11[%c0_9, %c0_10], %9 {strides = array<i32>} : memref<8x256xf32, #tpu.memory_space<vmem>>, vector<8x256xf32>,
    %c0_11 = arith.constant 0 : index
    %c0_12 = arith.constant 0 : index
    %c0_13 = arith.constant 0 : index
    %11 = vector.load %arg3[%c0_11, %c0_12, %c0_13] : memref<8x8x32xf32, #tpu.memory_space<vmem>>, vector<8x8x32xf32>
    %cst_14 = arith.constant dense<0.000000e+00> : vector<8x32xf32>
    %12 = vector.multi_reduction <add>, %11, %cst_14 [1] : vector<8x8x32xf32> to vector<8x32xf32>
    %c0_15 = arith.constant 0 : index
    %c0_16 = arith.constant 0 : index
    %13 = vector.load %arg11[%c0_15, %c0_16] : memref<8x256xf32, #tpu.memory_space<vmem>>, vector<8x256xf32>
    %c1 = arith.constant 1 : index
    %c0_17 = arith.constant 0 : index
    %c0_18 = arith.constant 0 : index
    %14 = vector.load %arg6[%c1, %c0_17, %c0_18] : memref<4x32x256xf32, #tpu.memory_space<vmem>>, vector<1x32x256xf32>
    %15 = vector.shape_cast %14 : vector<1x32x256xf32> to vector<32x256xf32>
    %cst_19 = arith.constant dense<0.000000e+00> : vector<8x256xf32>
    %16 = tpu.matmul %12, %15, %cst_19 {dimension_numbers = #tpu.dot_dimension_numbers<[1], [0], [0], [1], [0, 0, 1, 1], [], []>} : vector<8x32xf32>, vector<32x256xf32>, vector<8x256xf32> -> vector<8x256xf32>
    %17 = arith.addf %13, %16 : vector<8x256xf32>
    %c0_20 = arith.constant 0 : index
    %c0_21 = arith.constant 0 : index
    %18 = vector.load %arg11[%c0_20, %c0_21] : memref<8x256xf32, #tpu.memory_space<vmem>>, vector<8x256xf32>
    tpu.vector_store %arg11[%c0_20, %c0_21], %17 {strides = array<i32>} : memref<8x256xf32, #tpu.memory_space<vmem>>, vector<8x256xf32>,
    %c0_22 = arith.constant 0 : index
    %c0_23 = arith.constant 0 : index
    %c0_24 = arith.constant 0 : index
    %19 = vector.load %arg4[%c0_22, %c0_23, %c0_24] : memref<8x8x32xf32, #tpu.memory_space<vmem>>, vector<8x8x32xf32>
    %cst_25 = arith.constant dense<0.000000e+00> : vector<8x32xf32>
    %20 = vector.multi_reduction <add>, %19, %cst_25 [1] : vector<8x8x32xf32> to vector<8x32xf32>
    %c0_26 = arith.constant 0 : index
    %c0_27 = arith.constant 0 : index
    %21 = vector.load %arg11[%c0_26, %c0_27] : memref<8x256xf32, #tpu.memory_space<vmem>>, vector<8x256xf32>
    %c2 = arith.constant 2 : index
    %c0_28 = arith.constant 0 : index
    %c0_29 = arith.constant 0 : index
    %22 = vector.load %arg6[%c2, %c0_28, %c0_29] : memref<4x32x256xf32, #tpu.memory_space<vmem>>, vector<1x32x256xf32>
    %23 = vector.shape_cast %22 : vector<1x32x256xf32> to vector<32x256xf32>
    %cst_30 = arith.constant dense<0.000000e+00> : vector<8x256xf32>
    %24 = tpu.matmul %20, %23, %cst_30 {dimension_numbers = #tpu.dot_dimension_numbers<[1], [0], [0], [1], [0, 0, 1, 1], [], []>} : vector<8x32xf32>, vector<32x256xf32>, vector<8x256xf32> -> vector<8x256xf32>
    %25 = arith.addf %21, %24 : vector<8x256xf32>
    %c0_31 = arith.constant 0 : index
    %c0_32 = arith.constant 0 : index
    %26 = vector.load %arg11[%c0_31, %c0_32] : memref<8x256xf32, #tpu.memory_space<vmem>>, vector<8x256xf32>
    tpu.vector_store %arg11[%c0_31, %c0_32], %25 {strides = array<i32>} : memref<8x256xf32, #tpu.memory_space<vmem>>, vector<8x256xf32>,
    %c0_33 = arith.constant 0 : index
    %c0_34 = arith.constant 0 : index
    %c0_35 = arith.constant 0 : index
    %27 = vector.load %arg5[%c0_33, %c0_34, %c0_35] : memref<8x8x32xf32, #tpu.memory_space<vmem>>, vector<8x8x32xf32>
    %cst_36 = arith.constant dense<0.000000e+00> : vector<8x32xf32>
    %28 = vector.multi_reduction <add>, %27, %cst_36 [1] : vector<8x8x32xf32> to vector<8x32xf32>
    %c0_37 = arith.constant 0 : index
    %c0_38 = arith.constant 0 : index
    %29 = vector.load %arg11[%c0_37, %c0_38] : memref<8x256xf32, #tpu.memory_space<vmem>>, vector<8x256xf32>
    %c3 = arith.constant 3 : index
    %c0_39 = arith.constant 0 : index
    %c0_40 = arith.constant 0 : index
    %30 = vector.load %arg6[%c3, %c0_39, %c0_40] : memref<4x32x256xf32, #tpu.memory_space<vmem>>, vector<1x32x256xf32>
    %31 = vector.shape_cast %30 : vector<1x32x256xf32> to vector<32x256xf32>
    %cst_41 = arith.constant dense<0.000000e+00> : vector<8x256xf32>
    %32 = tpu.matmul %28, %31, %cst_41 {dimension_numbers = #tpu.dot_dimension_numbers<[1], [0], [0], [1], [0, 0, 1, 1], [], []>} : vector<8x32xf32>, vector<32x256xf32>, vector<8x256xf32> -> vector<8x256xf32>
    %33 = arith.addf %29, %32 : vector<8x256xf32>
    %c0_42 = arith.constant 0 : index
    %c0_43 = arith.constant 0 : index
    %34 = vector.load %arg11[%c0_42, %c0_43] : memref<8x256xf32, #tpu.memory_space<vmem>>, vector<8x256xf32>
    tpu.vector_store %arg11[%c0_42, %c0_43], %33 {strides = array<i32>} : memref<8x256xf32, #tpu.memory_space<vmem>>, vector<8x256xf32>,
    %c0_i32_44 = arith.constant 0 : i32
    %35 = arith.cmpi eq, %arg1, %c0_i32_44 : i32
    %36 = arith.extui %35 : i1 to i32
    %c0_i32_45 = arith.constant 0 : i32
    %37 = arith.cmpi ne, %36, %c0_i32_45 : i32
    scf.if %37 {
      %c0_46 = arith.constant 0 : index
      %c0_47 = arith.constant 0 : index
      %38 = vector.load %arg11[%c0_46, %c0_47] : memref<8x256xf32, #tpu.memory_space<vmem>>, vector<8x256xf32>
      %cst_48 = arith.constant 1.250000e-01 : f32
      %39 = vector.broadcast %cst_48 : f32 to vector<8x256xf32>
      %40 = arith.mulf %38, %39 : vector<8x256xf32>
      %c0_49 = arith.constant 0 : index
      %c0_50 = arith.constant 0 : index
      %41 = vector.load %arg7[%c0_49, %c0_50] : memref<1x256xf32, #tpu.memory_space<vmem>>, vector<1x256xf32>
      %42 = vector.broadcast %41 : vector<1x256xf32> to vector<8x256xf32>
      %43 = arith.addf %40, %42 : vector<8x256xf32>
      %cst_51 = arith.constant 0.000000e+00 : f32
      %44 = vector.broadcast %cst_51 : f32 to vector<8x256xf32>
      %45 = arith.maximumf %43, %44 : vector<8x256xf32>
      %c0_52 = arith.constant 0 : index
      %c0_53 = arith.constant 0 : index
      %46 = vector.load %arg8[%c0_52, %c0_53] : memref<256x128xf32, #tpu.memory_space<vmem>>, vector<256x128xf32>
      %cst_54 = arith.constant dense<0.000000e+00> : vector<8x128xf32>
      %47 = tpu.matmul %45, %46, %cst_54 {dimension_numbers = #tpu.dot_dimension_numbers<[1], [0], [0], [1], [0, 0, 1, 1], [], []>} : vector<8x256xf32>, vector<256x128xf32>, vector<8x128xf32> -> vector<8x128xf32>
      %c0_55 = arith.constant 0 : index
      %c0_56 = arith.constant 0 : index
      %48 = vector.load %arg9[%c0_55, %c0_56] : memref<1x128xf32, #tpu.memory_space<vmem>>, vector<1x128xf32>
      %49 = vector.broadcast %48 : vector<1x128xf32> to vector<8x128xf32>
      %50 = arith.addf %47, %49 : vector<8x128xf32>
      %cst_57 = arith.constant 0.000000e+00 : f32
      %51 = vector.broadcast %cst_57 : f32 to vector<8x128xf32>
      %52 = arith.maximumf %50, %51 : vector<8x128xf32>
      %c0_58 = arith.constant 0 : index
      %c0_59 = arith.constant 0 : index
      %53 = vector.load %arg10[%c0_58, %c0_59] : memref<8x128xf32, #tpu.memory_space<vmem>>, vector<8x128xf32>
      tpu.vector_store %arg10[%c0_58, %c0_59], %52 {strides = array<i32>} : memref<8x128xf32, #tpu.memory_space<vmem>>, vector<8x128xf32>,
    } else {
    }
    return
  }
  func.func @transform_0(%arg0: i32, %arg1: i32) -> (i32, i32, i32) {
    %c0_i32 = arith.constant 0 : i32
    %c0_i32_0 = arith.constant 0 : i32
    return %arg0, %arg1, %c0_i32 : i32, i32, i32
  }
  func.func @transform_1(%arg0: i32, %arg1: i32) -> (i32, i32, i32) {
    %c0_i32 = arith.constant 0 : i32
    %c0_i32_0 = arith.constant 0 : i32
    return %arg0, %arg1, %c0_i32 : i32, i32, i32
  }
  func.func @transform_2(%arg0: i32, %arg1: i32) -> (i32, i32, i32) {
    %c0_i32 = arith.constant 0 : i32
    %c0_i32_0 = arith.constant 0 : i32
    return %arg0, %arg1, %c0_i32 : i32, i32, i32
  }
  func.func @transform_3(%arg0: i32, %arg1: i32) -> (i32, i32, i32) {
    %c0_i32 = arith.constant 0 : i32
    %c0_i32_0 = arith.constant 0 : i32
    return %arg0, %arg1, %c0_i32 : i32, i32, i32
  }
  func.func @transform_4(%arg0: i32, %arg1: i32) -> (i32, i32, i32) {
    %c0_i32 = arith.constant 0 : i32
    %c0_i32_0 = arith.constant 0 : i32
    %c0_i32_1 = arith.constant 0 : i32
    %c0_i32_2 = arith.constant 0 : i32
    return %c0_i32, %c0_i32_0, %c0_i32_1 : i32, i32, i32
  }
  func.func @transform_5(%arg0: i32, %arg1: i32) -> (i32, i32) {
    %c0_i32 = arith.constant 0 : i32
    %c0_i32_0 = arith.constant 0 : i32
    %c0_i32_1 = arith.constant 0 : i32
    return %c0_i32, %c0_i32_0 : i32, i32
  }
  func.func @transform_6(%arg0: i32, %arg1: i32) -> (i32, i32) {
    %c0_i32 = arith.constant 0 : i32
    %c0_i32_0 = arith.constant 0 : i32
    %c0_i32_1 = arith.constant 0 : i32
    return %c0_i32, %c0_i32_0 : i32, i32
  }
  func.func @transform_7(%arg0: i32, %arg1: i32) -> (i32, i32) {
    %c0_i32 = arith.constant 0 : i32
    %c0_i32_0 = arith.constant 0 : i32
    %c0_i32_1 = arith.constant 0 : i32
    return %c0_i32, %c0_i32_0 : i32, i32
  }
  func.func @transform_8(%arg0: i32, %arg1: i32) -> (i32, i32) {
    %c0_i32 = arith.constant 0 : i32
    %c0_i32_0 = arith.constant 0 : i32
    return %arg0, %c0_i32 : i32, i32
  }
}

</mosaic_0001>

<llo_original>
// kernel: tpu_custom_call.1
$region0: #{tpu_custom_call.1}
  #allocation0 [shape = 'u32[]', space=smem, size = 0x4, offset = 0x4, fixed_abs, tag = 'smem constant byte address 0x4 - core index']
  #allocation1 [shape = 'u32[72,128]{1,0:T(1,128)}', space=vmem, size = 0x9000, scoped, tag = 'internal scratch']
  #allocation2 [shape = 'f32[8,256]{1,0:T(8,128)}', space=vmem, size = 0x2000, scoped, tag = 'scratch operand']
  %s0 = inlined_call_operand.hbm [shape: f32[2,8,32], index: 0, kind: input, shape index: {}]
  %s1 = inlined_call_operand.hbm [shape: f32[2,8,32], index: 1, kind: input, shape index: {}]
  %s2 = inlined_call_operand.hbm [shape: f32[2,8,32], index: 2, kind: input, shape index: {}]
  %s3 = inlined_call_operand.hbm [shape: f32[2,8,32], index: 3, kind: input, shape index: {}]
  %s4 = inlined_call_operand.hbm [shape: f32[4,32,256], index: 4, kind: input, shape index: {}]
  %s5 = inlined_call_operand.vmem [shape: f32[1,256], index: 5, kind: input, shape index: {}]
  %s6 = inlined_call_operand.hbm [shape: f32[256,128], index: 6, kind: input, shape index: {}]
  %s7 = inlined_call_operand.vmem [shape: f32[1,128], index: 7, kind: input, shape index: {}]
  %s8 = inlined_call_operand.hbm [shape: f32[8,128], index: 8, kind: output, shape index: {}]
  %s9 = sld [smem:[#allocation0]]
  $region74: #{tpu_custom_call.1} parent=0
    _
  %s11 = ssub.s32 1, %s9
  %s12 = scalar_select 0, %s11, %s9
  $region1: #{tpu_custom_call.1} parent=0
    #allocation3 [shape = 'u8[32768]{0}', space=vmem, size = 0x8000, scoped, tag = 'input window, operand 0, single buffered']
    #allocation4 [shape = 's32[1]{0}', space=sflag, size = 0x4, scoped, tag = 'scoped memory for tpu_custom_call.1']
    #allocation5 [shape = 's32[1]{0}', space=sflag, size = 0x4, scoped, tag = 'scoped memory for tpu_custom_call.1']
    #allocation6 [shape = 'u8[32768]{0}', space=vmem, size = 0x8000, scoped, tag = 'input window, operand 1, single buffered']
    #allocation7 [shape = 's32[1]{0}', space=sflag, size = 0x4, scoped, tag = 'scoped memory for tpu_custom_call.1']
    #allocation8 [shape = 'u8[32768]{0}', space=vmem, size = 0x8000, scoped, tag = 'input window, operand 2, single buffered']
    #allocation9 [shape = 'u8[32768]{0}', space=vmem, size = 0x8000, scoped, tag = 'input window, operand 3, single buffered']
    #allocation10 [shape = 's32[1]{0}', space=sflag, size = 0x4, scoped, tag = 'scoped memory for tpu_custom_call.1']
    #allocation11 [shape = 'u8[131072]{0}', space=vmem, size = 0x20000, scoped, tag = 'input window, operand 4, single buffered']
    #allocation12 [shape = 'u8[131072]{0}', space=vmem, size = 0x20000, scoped, tag = 'input window, operand 6, single buffered']
    #allocation13 [shape = 's32[1]{0}', space=sflag, size = 0x4, scoped, tag = 'scoped memory for tpu_custom_call.1']
    #allocation14 [shape = 'u8[4096]{0}', space=vmem, size = 0x1000, scoped, tag = 'output window, operand 0, single buffered']
    %13 = vsyncpa [#allocation4], 0
    %14 = vsyncpa [#allocation7], 0
    %15 = vsyncpa [#allocation10], 0
    %16 = vsyncpa [#allocation13], 0
    %17 = vsyncpa [#allocation5], 0
    // Predicated region
    $region2: #{tpu_custom_call.1} parent=1 // pred_check
      _
    $region3: #{tpu_custom_call.1} parent=1 // pred_check_branch
      %19 = sbr.rel (0) target = $region5
    $region4: #{tpu_custom_call.1} parent=1 // pred_region
      %21 = vsyncadd [#allocation4], 768
      %s22 = sshll.u32 %s0, 4
      %s23 = int_to_ptr.hbm [resolvable:$true] %s22
      %s24 = sshll.u32 [#allocation3], 4
      %s25 = int_to_ptr.vmem [resolvable:$true] %s24
      %30 = dma.hbm_to_vmem [thread:$0]  %s23, 256, %s25, [#allocation4], 128, 128, 8
    $region5: #{tpu_custom_call.1} parent=1 // pred_fallthru
      _
    // Predicated region
    $region6: #{tpu_custom_call.1} parent=1 // pred_check
      _
    $region7: #{tpu_custom_call.1} parent=1 // pred_check_branch
      %32 = sbr.rel (0) target = $region9
    $region8: #{tpu_custom_call.1} parent=1 // pred_region
      %34 = vsyncadd [#allocation7], 768
      %s35 = sshll.u32 %s1, 4
      %s36 = int_to_ptr.hbm [resolvable:$true] %s35
      %s37 = sshll.u32 [#allocation6], 4
      %s38 = int_to_ptr.vmem [resolvable:$true] %s37
      %43 = dma.hbm_to_vmem [thread:$0]  %s36, 256, %s38, [#allocation7], 128, 128, 8
    $region9: #{tpu_custom_call.1} parent=1 // pred_fallthru
      _
    // Predicated region
    $region10: #{tpu_custom_call.1} parent=1 // pred_check
      _
    $region11: #{tpu_custom_call.1} parent=1 // pred_check_branch
      %45 = sbr.rel (0) target = $region13
    $region12: #{tpu_custom_call.1} parent=1 // pred_region
      %47 = vsyncadd [#allocation7], 768
      %s48 = sshll.u32 %s2, 4
      %s49 = int_to_ptr.hbm [resolvable:$true] %s48
      %s50 = sshll.u32 [#allocation8], 4
      %s51 = int_to_ptr.vmem [resolvable:$true] %s50
      %56 = dma.hbm_to_vmem [thread:$0]  %s49, 256, %s51, [#allocation7], 128, 128, 8
    $region13: #{tpu_custom_call.1} parent=1 // pred_fallthru
      _
    // Predicated region
    $region14: #{tpu_custom_call.1} parent=1 // pred_check
      _
    $region15: #{tpu_custom_call.1} parent=1 // pred_check_branch
      %58 = sbr.rel (0) target = $region17
    $region16: #{tpu_custom_call.1} parent=1 // pred_region
      %60 = vsyncadd [#allocation10], 768
      %s61 = sshll.u32 %s3, 4
      %s62 = int_to_ptr.hbm [resolvable:$true] %s61
      %s63 = sshll.u32 [#allocation9], 4
      %s64 = int_to_ptr.vmem [resolvable:$true] %s63
      %69 = dma.hbm_to_vmem [thread:$0]  %s62, 256, %s64, [#allocation10], 128, 128, 8
    $region17: #{tpu_custom_call.1} parent=1 // pred_fallthru
      _
    // Predicated region
    $region18: #{tpu_custom_call.1} parent=1 // pred_check
      _
    $region19: #{tpu_custom_call.1} parent=1 // pred_check_branch
      %71 = sbr.rel (0) target = $region21
    $region20: #{tpu_custom_call.1} parent=1 // pred_region
      %73 = vsyncadd [#allocation10], 0
      %s74 = sshll.u32 %s4, 4
      %s75 = int_to_ptr.hbm [resolvable:$true] %s74
      %s76 = sshll.u32 [#allocation11], 4
      %s77 = int_to_ptr.vmem [resolvable:$true] %s76
      %82 = dma.hbm_to_vmem [thread:$0]  %s75, 4096, %s77, [#allocation10], 256, 256, 16
    $region21: #{tpu_custom_call.1} parent=1 // pred_fallthru
      _
    // Predicated region
    $region22: #{tpu_custom_call.1} parent=1 // pred_check
      _
    $region23: #{tpu_custom_call.1} parent=1 // pred_check_branch
      %84 = sbr.rel (0) target = $region25
    $region24: #{tpu_custom_call.1} parent=1 // pred_region
      _
    $region25: #{tpu_custom_call.1} parent=1 // pred_fallthru
      _
    // Predicated region
    $region26: #{tpu_custom_call.1} parent=1 // pred_check
      _
    $region27: #{tpu_custom_call.1} parent=1 // pred_check_branch
      %86 = sbr.rel (0) target = $region29
    $region28: #{tpu_custom_call.1} parent=1 // pred_region
      %88 = vsyncadd [#allocation13], 0
      %s89 = sshll.u32 %s6, 4
      %s90 = int_to_ptr.hbm [resolvable:$true] %s89
      %s91 = sshll.u32 [#allocation12], 4
      %s92 = int_to_ptr.vmem [resolvable:$true] %s91
      %97 = dma.hbm_to_vmem [thread:$0]  %s90, 4096, %s92, [#allocation13], 128, 128, 8
    $region29: #{tpu_custom_call.1} parent=1 // pred_fallthru
      _
    // Predicated region
    $region30: #{tpu_custom_call.1} parent=1 // pred_check
      _
    $region31: #{tpu_custom_call.1} parent=1 // pred_check_branch
      %99 = sbr.rel (0) target = $region33
    $region32: #{tpu_custom_call.1} parent=1 // pred_region
      _
    $region33: #{tpu_custom_call.1} parent=1 // pred_fallthru
      _
    // Predicated region
    $region34: #{tpu_custom_call.1} parent=1 // pred_check
      _
    $region35: #{tpu_custom_call.1} parent=1 // pred_check_branch
      %101 = sbr.rel (0) target = $region37
    $region36: #{tpu_custom_call.1} parent=1 // pred_region
      %103 = dma.done [#allocation4], 1024
    $region37: #{tpu_custom_call.1} parent=1 // pred_fallthru
      _
    // Predicated region
    $region38: #{tpu_custom_call.1} parent=1 // pred_check
      _
    $region39: #{tpu_custom_call.1} parent=1 // pred_check_branch
      %105 = sbr.rel (0) target = $region41
    $region40: #{tpu_custom_call.1} parent=1 // pred_region
      %107 = dma.done [#allocation7], 1024
    $region41: #{tpu_custom_call.1} parent=1 // pred_fallthru
      _
    // Predicated region
    $region42: #{tpu_custom_call.1} parent=1 // pred_check
      _
    $region43: #{tpu_custom_call.1} parent=1 // pred_check_branch
      %109 = sbr.rel (0) target = $region45
    $region44: #{tpu_custom_call.1} parent=1 // pred_region
      %111 = dma.done [#allocation7], 1024
    $region45: #{tpu_custom_call.1} parent=1 // pred_fallthru
      _
    // Predicated region
    $region46: #{tpu_custom_call.1} parent=1 // pred_check
      _
    $region47: #{tpu_custom_call.1} parent=1 // pred_check_branch
      %113 = sbr.rel (0) target = $region49
    $region48: #{tpu_custom_call.1} parent=1 // pred_region
      %115 = dma.done [#allocation10], 1024
    $region49: #{tpu_custom_call.1} parent=1 // pred_fallthru
      _
    // Predicated region
    $region50: #{tpu_custom_call.1} parent=1 // pred_check
      _
    $region51: #{tpu_custom_call.1} parent=1 // pred_check_branch
      %117 = sbr.rel (0) target = $region53
    $region52: #{tpu_custom_call.1} parent=1 // pred_region
      %119 = dma.done [#allocation10], 4096
    $region53: #{tpu_custom_call.1} parent=1 // pred_fallthru
      _
    // Predicated region
    $region54: #{tpu_custom_call.1} parent=1 // pred_check
      _
    $region55: #{tpu_custom_call.1} parent=1 // pred_check_branch
      %121 = sbr.rel (0) target = $region57
    $region56: #{tpu_custom_call.1} parent=1 // pred_region
      %123 = dma.done [#allocation13], 4096
    $region57: #{tpu_custom_call.1} parent=1 // pred_fallthru
      _
    %p124 = scmp.eq.s32.totalorder 0, 0
    // Predicated region
    $region58: #{tpu_custom_call.1} parent=1 // pred_check
      %p125 = pneg %p124
    $region59: #{tpu_custom_call.1} parent=1 // pred_check_branch
      %127 = sbr.rel (%p125) target = $region61
    $region60: #{tpu_custom_call.1} parent=1 // pred_region
      %128 = vst [vmem:[#allocation2] sm:$0xff] 0.0
      %129 = vst [vmem:[#allocation2 + $0x8] sm:$0xff] 0.0
    $region61: #{tpu_custom_call.1} parent=1 // pred_fallthru
      _
    %v130 = vld [vmem:[#allocation3] sm:$0xff]
    %v131 = vld [vmem:[#allocation3 + $0x8] sm:$0xff]
    %v132 = vld [vmem:[#allocation3 + $0x10] sm:$0xff]
    %v133 = vld [vmem:[#allocation3 + $0x18] sm:$0xff]
    %v134 = vld [vmem:[#allocation3 + $0x20] sm:$0xff]
    %v135 = vld [vmem:[#allocation3 + $0x28] sm:$0xff]
    %v136 = vld [vmem:[#allocation3 + $0x30] sm:$0xff]
    %v137 = vld [vmem:[#allocation3 + $0x38] sm:$0xff]
    %vm138 = vcmask 261120
    %v139 = vsel %vm138, %v130, 0.0
    %v140 = vrot.slane %v139, 4
    %v141 = vadd.f32 %v139, %v140
    %v142 = vrot.slane %v141, 2
    %v143 = vadd.f32 %v141, %v142
    %v144 = vrot.slane %v143, 1
    %v145 = vadd.f32 %v143, %v144
    %v146 = vsel %vm138, %v131, 0.0
    %v147 = vrot.slane %v146, 4
    %v148 = vadd.f32 %v146, %v147
    %v149 = vrot.slane %v148, 2
    %v150 = vadd.f32 %v148, %v149
    %v151 = vrot.slane %v150, 1
    %v152 = vadd.f32 %v150, %v151
    %v153 = vsel %vm138, %v132, 0.0
    %v154 = vrot.slane %v153, 4
    %v155 = vadd.f32 %v153, %v154
    %v156 = vrot.slane %v155, 2
    %v157 = vadd.f32 %v155, %v156
    %v158 = vrot.slane %v157, 1
    %v159 = vadd.f32 %v157, %v158
    %v160 = vsel %vm138, %v133, 0.0
    %v161 = vrot.slane %v160, 4
    %v162 = vadd.f32 %v160, %v161
    %v163 = vrot.slane %v162, 2
    %v164 = vadd.f32 %v162, %v163
    %v165 = vrot.slane %v164, 1
    %v166 = vadd.f32 %v164, %v165
    %v167 = vsel %vm138, %v134, 0.0
    %v168 = vrot.slane %v167, 4
    %v169 = vadd.f32 %v167, %v168
    %v170 = vrot.slane %v169, 2
    %v171 = vadd.f32 %v169, %v170
    %v172 = vrot.slane %v171, 1
    %v173 = vadd.f32 %v171, %v172
    %v174 = vsel %vm138, %v135, 0.0
    %v175 = vrot.slane %v174, 4
    %v176 = vadd.f32 %v174, %v175
    %v177 = vrot.slane %v176, 2
    %v178 = vadd.f32 %v176, %v177
    %v179 = vrot.slane %v178, 1
    %v180 = vadd.f32 %v178, %v179
    %v181 = vsel %vm138, %v136, 0.0
    %v182 = vrot.slane %v181, 4
    %v183 = vadd.f32 %v181, %v182
    %v184 = vrot.slane %v183, 2
    %v185 = vadd.f32 %v183, %v184
    %v186 = vrot.slane %v185, 1
    %v187 = vadd.f32 %v185, %v186
    %v188 = vsel %vm138, %v137, 0.0
    %v189 = vrot.slane %v188, 4
    %v190 = vadd.f32 %v188, %v189
    %v191 = vrot.slane %v190, 2
    %v192 = vadd.f32 %v190, %v191
    %v193 = vrot.slane %v192, 1
    %v194 = vadd.f32 %v192, %v193
    %v195 = vld [vmem:[#allocation2] sm:$0xff]
    %v196 = vld [vmem:[#allocation2 + $0x8] sm:$0xff]
    %v197 = vld [vmem:[#allocation11] sm:$0xff]
    %v198 = vld [vmem:[#allocation11 + $0x8] sm:$0xff]
    %v199 = vld [vmem:[#allocation11 + $0x10] sm:$0xff]
    %v200 = vld [vmem:[#allocation11 + $0x18] sm:$0xff]
    %v201 = vld [vmem:[#allocation11 + $0x20] sm:$0xff]
    %v202 = vld [vmem:[#allocation11 + $0x28] sm:$0xff]
    %v203 = vld [vmem:[#allocation11 + $0x30] sm:$0xff]
    %v204 = vld [vmem:[#allocation11 + $0x38] sm:$0xff]
    %vm213 = vcmask 1041409
    %v214 = vsel %vm213, %v152, %v145
    %vm215 = vcmask 1042434
    %v216 = vsel %vm215, %v159, %v214
    %vm217 = vcmask 1043459
    %v218 = vsel %vm217, %v166, %v216
    %vm219 = vcmask 1044484
    %v220 = vsel %vm219, %v173, %v218
    %vm221 = vcmask 1045509
    %v222 = vsel %vm221, %v180, %v220
    %vm223 = vcmask 1046534
    %v224 = vsel %vm223, %v187, %v222
    %vm225 = vcmask 1047559
    %v226 = vsel %vm225, %v194, %v224
    %v227 = vsel %vm138, %v226, 0
    %229 = vmatpush.msra.mxu0 0.0
    %230 = vmatpush.msra.mxu0 0.0
    %231 = vmatpush.msra.mxu0 0.0
    %232 = vmatpush.msra.mxu0 0.0
    %233 = vmatpush.msra.mxu0 0.0
    %234 = vmatpush.msra.mxu0 0.0
    %235 = vmatpush.msra.mxu0 0.0
    %236 = vmatpush.msra.mxu0 0.0
    %237 = vmatpush.msra.mxu0 0.0
    %238 = vmatpush.msra.mxu0 0.0
    %239 = vmatpush.msra.mxu0 0.0
    %240 = vmatpush.msra.mxu0 0.0
    %241 = vmatpush.msra.mxu0 %v203
    %242 = vmatpush.msra.mxu0 %v201
    %243 = vmatpush.msra.mxu0 %v199
    %244 = vmatpush.msra.mxu0 %v197
    %245 = vmatmul.f32.gmra.mxu0 %v227
    %v246 = vpop.f32.mrf.mxu0
    %v247 = vadd.f32 0.0, %v246
    %248 = vdwg.mxu0
    %249 = vmatpush.msra.mxu0 0.0
    %250 = vmatpush.msra.mxu0 0.0
    %251 = vmatpush.msra.mxu0 0.0
    %252 = vmatpush.msra.mxu0 0.0
    %253 = vmatpush.msra.mxu0 0.0
    %254 = vmatpush.msra.mxu0 0.0
    %255 = vmatpush.msra.mxu0 0.0
    %256 = vmatpush.msra.mxu0 0.0
    %257 = vmatpush.msra.mxu0 0.0
    %258 = vmatpush.msra.mxu0 0.0
    %259 = vmatpush.msra.mxu0 0.0
    %260 = vmatpush.msra.mxu0 0.0
    %261 = vmatpush.msra.mxu0 %v204
    %262 = vmatpush.msra.mxu0 %v202
    %263 = vmatpush.msra.mxu0 %v200
    %264 = vmatpush.msra.mxu0 %v198
    %265 = vmatmul.f32.gmra.mxu0 %v227
    %v266 = vpop.f32.mrf.mxu0
    %v267 = vadd.f32 0.0, %v266
    %268 = vdwg.mxu0
    %v269 = vadd.f32 %v195, %v247
    %v270 = vadd.f32 %v196, %v267
    %271 = vst [vmem:[#allocation2] sm:$0xff] %v269
    %272 = vst [vmem:[#allocation2 + $0x8] sm:$0xff] %v270
    %v273 = vld [vmem:[#allocation6] sm:$0xff]
    %v274 = vld [vmem:[#allocation6 + $0x8] sm:$0xff]
    %v275 = vld [vmem:[#allocation6 + $0x10] sm:$0xff]
    %v276 = vld [vmem:[#allocation6 + $0x18] sm:$0xff]
    %v277 = vld [vmem:[#allocation6 + $0x20] sm:$0xff]
    %v278 = vld [vmem:[#allocation6 + $0x28] sm:$0xff]
    %v279 = vld [vmem:[#allocation6 + $0x30] sm:$0xff]
    %v280 = vld [vmem:[#allocation6 + $0x38] sm:$0xff]
    %v281 = vsel %vm138, %v273, 0.0
    %v282 = vrot.slane %v281, 4
    %v283 = vadd.f32 %v281, %v282
    %v284 = vrot.slane %v283, 2
    %v285 = vadd.f32 %v283, %v284
    %v286 = vrot.slane %v285, 1
    %v287 = vadd.f32 %v285, %v286
    %v288 = vsel %vm138, %v274, 0.0
    %v289 = vrot.slane %v288, 4
    %v290 = vadd.f32 %v288, %v289
    %v291 = vrot.slane %v290, 2
    %v292 = vadd.f32 %v290, %v291
    %v293 = vrot.slane %v292, 1
    %v294 = vadd.f32 %v292, %v293
    %v295 = vsel %vm138, %v275, 0.0
    %v296 = vrot.slane %v295, 4
    %v297 = vadd.f32 %v295, %v296
    %v298 = vrot.slane %v297, 2
    %v299 = vadd.f32 %v297, %v298
    %v300 = vrot.slane %v299, 1
    %v301 = vadd.f32 %v299, %v300
    %v302 = vsel %vm138, %v276, 0.0
    %v303 = vrot.slane %v302, 4
    %v304 = vadd.f32 %v302, %v303
    %v305 = vrot.slane %v304, 2
    %v306 = vadd.f32 %v304, %v305
    %v307 = vrot.slane %v306, 1
    %v308 = vadd.f32 %v306, %v307
    %v309 = vsel %vm138, %v277, 0.0
    %v310 = vrot.slane %v309, 4
    %v311 = vadd.f32 %v309, %v310
    %v312 = vrot.slane %v311, 2
    %v313 = vadd.f32 %v311, %v312
    %v314 = vrot.slane %v313, 1
    %v315 = vadd.f32 %v313, %v314
    %v316 = vsel %vm138, %v278, 0.0
    %v317 = vrot.slane %v316, 4
    %v318 = vadd.f32 %v316, %v317
    %v319 = vrot.slane %v318, 2
    %v320 = vadd.f32 %v318, %v319
    %v321 = vrot.slane %v320, 1
    %v322 = vadd.f32 %v320, %v321
    %v323 = vsel %vm138, %v279, 0.0
    %v324 = vrot.slane %v323, 4
    %v325 = vadd.f32 %v323, %v324
    %v326 = vrot.slane %v325, 2
    %v327 = vadd.f32 %v325, %v326
    %v328 = vrot.slane %v327, 1
    %v329 = vadd.f32 %v327, %v328
    %v330 = vsel %vm138, %v280, 0.0
    %v331 = vrot.slane %v330, 4
    %v332 = vadd.f32 %v330, %v331
    %v333 = vrot.slane %v332, 2
    %v334 = vadd.f32 %v332, %v333
    %v335 = vrot.slane %v334, 1
    %v336 = vadd.f32 %v334, %v335
    %v337 = vld [vmem:[#allocation2] sm:$0xff]
    %v338 = vld [vmem:[#allocation2 + $0x8] sm:$0xff]
    %s339 = scalar_lea.vmem [#allocation11], 64
    %v340 = vld [vmem:[%s339] sm:$0xff]
    %v341 = vld [vmem:[%s339 + $0x8] sm:$0xff]
    %v342 = vld [vmem:[%s339 + $0x10] sm:$0xff]
    %v343 = vld [vmem:[%s339 + $0x18] sm:$0xff]
    %v344 = vld [vmem:[%s339 + $0x20] sm:$0xff]
    %v345 = vld [vmem:[%s339 + $0x28] sm:$0xff]
    %v346 = vld [vmem:[%s339 + $0x30] sm:$0xff]
    %v347 = vld [vmem:[%s339 + $0x38] sm:$0xff]
    %v356 = vsel %vm213, %v294, %v287
    %v357 = vsel %vm215, %v301, %v356
    %v358 = vsel %vm217, %v308, %v357
    %v359 = vsel %vm219, %v315, %v358
    %v360 = vsel %vm221, %v322, %v359
    %v361 = vsel %vm223, %v329, %v360
    %v362 = vsel %vm225, %v336, %v361
    %v363 = vsel %vm138, %v362, 0
    %365 = vmatpush.msra.mxu0 0.0
    %366 = vmatpush.msra.mxu0 0.0
    %367 = vmatpush.msra.mxu0 0.0
    %368 = vmatpush.msra.mxu0 0.0
    %369 = vmatpush.msra.mxu0 0.0
    %370 = vmatpush.msra.mxu0 0.0
    %371 = vmatpush.msra.mxu0 0.0
    %372 = vmatpush.msra.mxu0 0.0
    %373 = vmatpush.msra.mxu0 0.0
    %374 = vmatpush.msra.mxu0 0.0
    %375 = vmatpush.msra.mxu0 0.0
    %376 = vmatpush.msra.mxu0 0.0
    %377 = vmatpush.msra.mxu0 %v346
    %378 = vmatpush.msra.mxu0 %v344
    %379 = vmatpush.msra.mxu0 %v342
    %380 = vmatpush.msra.mxu0 %v340
    %381 = vmatmul.f32.gmra.mxu0 %v363
    %v382 = vpop.f32.mrf.mxu0
    %v383 = vadd.f32 0.0, %v382
    %384 = vdwg.mxu0
    %385 = vmatpush.msra.mxu0 0.0
    %386 = vmatpush.msra.mxu0 0.0
    %387 = vmatpush.msra.mxu0 0.0
    %388 = vmatpush.msra.mxu0 0.0
    %389 = vmatpush.msra.mxu0 0.0
    %390 = vmatpush.msra.mxu0 0.0
    %391 = vmatpush.msra.mxu0 0.0
    %392 = vmatpush.msra.mxu0 0.0
    %393 = vmatpush.msra.mxu0 0.0
    %394 = vmatpush.msra.mxu0 0.0
    %395 = vmatpush.msra.mxu0 0.0
    %396 = vmatpush.msra.mxu0 0.0
    %397 = vmatpush.msra.mxu0 %v347
    %398 = vmatpush.msra.mxu0 %v345
    %399 = vmatpush.msra.mxu0 %v343
    %400 = vmatpush.msra.mxu0 %v341
    %401 = vmatmul.f32.gmra.mxu0 %v363
    %v402 = vpop.f32.mrf.mxu0
    %v403 = vadd.f32 0.0, %v402
    %404 = vdwg.mxu0
    %v405 = vadd.f32 %v337, %v383
    %v406 = vadd.f32 %v338, %v403
    %407 = vst [vmem:[#allocation2] sm:$0xff] %v405
    %408 = vst [vmem:[#allocation2 + $0x8] sm:$0xff] %v406
    %v409 = vld [vmem:[#allocation8] sm:$0xff]
    %v410 = vld [vmem:[#allocation8 + $0x8] sm:$0xff]
    %v411 = vld [vmem:[#allocation8 + $0x10] sm:$0xff]
    %v412 = vld [vmem:[#allocation8 + $0x18] sm:$0xff]
    %v413 = vld [vmem:[#allocation8 + $0x20] sm:$0xff]
    %v414 = vld [vmem:[#allocation8 + $0x28] sm:$0xff]
    %v415 = vld [vmem:[#allocation8 + $0x30] sm:$0xff]
    %v416 = vld [vmem:[#allocation8 + $0x38] sm:$0xff]
    %v417 = vsel %vm138, %v409, 0.0
    %v418 = vrot.slane %v417, 4
    %v419 = vadd.f32 %v417, %v418
    %v420 = vrot.slane %v419, 2
    %v421 = vadd.f32 %v419, %v420
    %v422 = vrot.slane %v421, 1
    %v423 = vadd.f32 %v421, %v422
    %v424 = vsel %vm138, %v410, 0.0
    %v425 = vrot.slane %v424, 4
    %v426 = vadd.f32 %v424, %v425
    %v427 = vrot.slane %v426, 2
    %v428 = vadd.f32 %v426, %v427
    %v429 = vrot.slane %v428, 1
    %v430 = vadd.f32 %v428, %v429
    %v431 = vsel %vm138, %v411, 0.0
    %v432 = vrot.slane %v431, 4
    %v433 = vadd.f32 %v431, %v432
    %v434 = vrot.slane %v433, 2
    %v435 = vadd.f32 %v433, %v434
    %v436 = vrot.slane %v435, 1
    %v437 = vadd.f32 %v435, %v436
    %v438 = vsel %vm138, %v412, 0.0
    %v439 = vrot.slane %v438, 4
    %v440 = vadd.f32 %v438, %v439
    %v441 = vrot.slane %v440, 2
    %v442 = vadd.f32 %v440, %v441
    %v443 = vrot.slane %v442, 1
    %v444 = vadd.f32 %v442, %v443
    %v445 = vsel %vm138, %v413, 0.0
    %v446 = vrot.slane %v445, 4
    %v447 = vadd.f32 %v445, %v446
    %v448 = vrot.slane %v447, 2
    %v449 = vadd.f32 %v447, %v448
    %v450 = vrot.slane %v449, 1
    %v451 = vadd.f32 %v449, %v450
    %v452 = vsel %vm138, %v414, 0.0
    %v453 = vrot.slane %v452, 4
    %v454 = vadd.f32 %v452, %v453
    %v455 = vrot.slane %v454, 2
    %v456 = vadd.f32 %v454, %v455
    %v457 = vrot.slane %v456, 1
    %v458 = vadd.f32 %v456, %v457
    %v459 = vsel %vm138, %v415, 0.0
    %v460 = vrot.slane %v459, 4
    %v461 = vadd.f32 %v459, %v460
    %v462 = vrot.slane %v461, 2
    %v463 = vadd.f32 %v461, %v462
    %v464 = vrot.slane %v463, 1
    %v465 = vadd.f32 %v463, %v464
    %v466 = vsel %vm138, %v416, 0.0
    %v467 = vrot.slane %v466, 4
    %v468 = vadd.f32 %v466, %v467
    %v469 = vrot.slane %v468, 2
    %v470 = vadd.f32 %v468, %v469
    %v471 = vrot.slane %v470, 1
    %v472 = vadd.f32 %v470, %v471
    %v473 = vld [vmem:[#allocation2] sm:$0xff]
    %v474 = vld [vmem:[#allocation2 + $0x8] sm:$0xff]
    %s475 = scalar_lea.vmem [#allocation11], 128
    %v476 = vld [vmem:[%s475] sm:$0xff]
    %v477 = vld [vmem:[%s475 + $0x8] sm:$0xff]
    %v478 = vld [vmem:[%s475 + $0x10] sm:$0xff]
    %v479 = vld [vmem:[%s475 + $0x18] sm:$0xff]
    %v480 = vld [vmem:[%s475 + $0x20] sm:$0xff]
    %v481 = vld [vmem:[%s475 + $0x28] sm:$0xff]
    %v482 = vld [vmem:[%s475 + $0x30] sm:$0xff]
    %v483 = vld [vmem:[%s475 + $0x38] sm:$0xff]
    %v492 = vsel %vm213, %v430, %v423
    %v493 = vsel %vm215, %v437, %v492
    %v494 = vsel %vm217, %v444, %v493
    %v495 = vsel %vm219, %v451, %v494
    %v496 = vsel %vm221, %v458, %v495
    %v497 = vsel %vm223, %v465, %v496
    %v498 = vsel %vm225, %v472, %v497
    %v499 = vsel %vm138, %v498, 0
    %501 = vmatpush.msra.mxu0 0.0
    %502 = vmatpush.msra.mxu0 0.0
    %503 = vmatpush.msra.mxu0 0.0
    %504 = vmatpush.msra.mxu0 0.0
    %505 = vmatpush.msra.mxu0 0.0
    %506 = vmatpush.msra.mxu0 0.0
    %507 = vmatpush.msra.mxu0 0.0
    %508 = vmatpush.msra.mxu0 0.0
    %509 = vmatpush.msra.mxu0 0.0
    %510 = vmatpush.msra.mxu0 0.0
    %511 = vmatpush.msra.mxu0 0.0
    %512 = vmatpush.msra.mxu0 0.0
    %513 = vmatpush.msra.mxu0 %v482
    %514 = vmatpush.msra.mxu0 %v480
    %515 = vmatpush.msra.mxu0 %v478
    %516 = vmatpush.msra.mxu0 %v476
    %517 = vmatmul.f32.gmra.mxu0 %v499
    %v518 = vpop.f32.mrf.mxu0
    %v519 = vadd.f32 0.0, %v518
    %520 = vdwg.mxu0
    %521 = vmatpush.msra.mxu0 0.0
    %522 = vmatpush.msra.mxu0 0.0
    %523 = vmatpush.msra.mxu0 0.0
    %524 = vmatpush.msra.mxu0 0.0
    %525 = vmatpush.msra.mxu0 0.0
    %526 = vmatpush.msra.mxu0 0.0
    %527 = vmatpush.msra.mxu0 0.0
    %528 = vmatpush.msra.mxu0 0.0
    %529 = vmatpush.msra.mxu0 0.0
    %530 = vmatpush.msra.mxu0 0.0
    %531 = vmatpush.msra.mxu0 0.0
    %532 = vmatpush.msra.mxu0 0.0
    %533 = vmatpush.msra.mxu0 %v483
    %534 = vmatpush.msra.mxu0 %v481
    %535 = vmatpush.msra.mxu0 %v479
    %536 = vmatpush.msra.mxu0 %v477
    %537 = vmatmul.f32.gmra.mxu0 %v499
    %v538 = vpop.f32.mrf.mxu0
    %v539 = vadd.f32 0.0, %v538
    %540 = vdwg.mxu0
    %v541 = vadd.f32 %v473, %v519
    %v542 = vadd.f32 %v474, %v539
    %543 = vst [vmem:[#allocation2] sm:$0xff] %v541
    %544 = vst [vmem:[#allocation2 + $0x8] sm:$0xff] %v542
    %v545 = vld [vmem:[#allocation9] sm:$0xff]
    %v546 = vld [vmem:[#allocation9 + $0x8] sm:$0xff]
    %v547 = vld [vmem:[#allocation9 + $0x10] sm:$0xff]
    %v548 = vld [vmem:[#allocation9 + $0x18] sm:$0xff]
    %v549 = vld [vmem:[#allocation9 + $0x20] sm:$0xff]
    %v550 = vld [vmem:[#allocation9 + $0x28] sm:$0xff]
    %v551 = vld [vmem:[#allocation9 + $0x30] sm:$0xff]
    %v552 = vld [vmem:[#allocation9 + $0x38] sm:$0xff]
    %v553 = vsel %vm138, %v545, 0.0
    %v554 = vrot.slane %v553, 4
    %v555 = vadd.f32 %v553, %v554
    %v556 = vrot.slane %v555, 2
    %v557 = vadd.f32 %v555, %v556
    %v558 = vrot.slane %v557, 1
    %v559 = vadd.f32 %v557, %v558
    %v560 = vsel %vm138, %v546, 0.0
    %v561 = vrot.slane %v560, 4
    %v562 = vadd.f32 %v560, %v561
    %v563 = vrot.slane %v562, 2
    %v564 = vadd.f32 %v562, %v563
    %v565 = vrot.slane %v564, 1
    %v566 = vadd.f32 %v564, %v565
    %v567 = vsel %vm138, %v547, 0.0
    %v568 = vrot.slane %v567, 4
    %v569 = vadd.f32 %v567, %v568
    %v570 = vrot.slane %v569, 2
    %v571 = vadd.f32 %v569, %v570
    %v572 = vrot.slane %v571, 1
    %v573 = vadd.f32 %v571, %v572
    %v574 = vsel %vm138, %v548, 0.0
    %v575 = vrot.slane %v574, 4
    %v576 = vadd.f32 %v574, %v575
    %v577 = vrot.slane %v576, 2
    %v578 = vadd.f32 %v576, %v577
    %v579 = vrot.slane %v578, 1
    %v580 = vadd.f32 %v578, %v579
    %v581 = vsel %vm138, %v549, 0.0
    %v582 = vrot.slane %v581, 4
    %v583 = vadd.f32 %v581, %v582
    %v584 = vrot.slane %v583, 2
    %v585 = vadd.f32 %v583, %v584
    %v586 = vrot.slane %v585, 1
    %v587 = vadd.f32 %v585, %v586
    %v588 = vsel %vm138, %v550, 0.0
    %v589 = vrot.slane %v588, 4
    %v590 = vadd.f32 %v588, %v589
    %v591 = vrot.slane %v590, 2
    %v592 = vadd.f32 %v590, %v591
    %v593 = vrot.slane %v592, 1
    %v594 = vadd.f32 %v592, %v593
    %v595 = vsel %vm138, %v551, 0.0
    %v596 = vrot.slane %v595, 4
    %v597 = vadd.f32 %v595, %v596
    %v598 = vrot.slane %v597, 2
    %v599 = vadd.f32 %v597, %v598
    %v600 = vrot.slane %v599, 1
    %v601 = vadd.f32 %v599, %v600
    %v602 = vsel %vm138, %v552, 0.0
    %v603 = vrot.slane %v602, 4
    %v604 = vadd.f32 %v602, %v603
    %v605 = vrot.slane %v604, 2
    %v606 = vadd.f32 %v604, %v605
    %v607 = vrot.slane %v606, 1
    %v608 = vadd.f32 %v606, %v607
    %v609 = vld [vmem:[#allocation2] sm:$0xff]
    %v610 = vld [vmem:[#allocation2 + $0x8] sm:$0xff]
    %s611 = scalar_lea.vmem [#allocation11], 192
    %v612 = vld [vmem:[%s611] sm:$0xff]
    %v613 = vld [vmem:[%s611 + $0x8] sm:$0xff]
    %v614 = vld [vmem:[%s611 + $0x10] sm:$0xff]
    %v615 = vld [vmem:[%s611 + $0x18] sm:$0xff]
    %v616 = vld [vmem:[%s611 + $0x20] sm:$0xff]
    %v617 = vld [vmem:[%s611 + $0x28] sm:$0xff]
    %v618 = vld [vmem:[%s611 + $0x30] sm:$0xff]
    %v619 = vld [vmem:[%s611 + $0x38] sm:$0xff]
    %v628 = vsel %vm213, %v566, %v559
    %v629 = vsel %vm215, %v573, %v628
    %v630 = vsel %vm217, %v580, %v629
    %v631 = vsel %vm219, %v587, %v630
    %v632 = vsel %vm221, %v594, %v631
    %v633 = vsel %vm223, %v601, %v632
    %v634 = vsel %vm225, %v608, %v633
    %v635 = vsel %vm138, %v634, 0
    %637 = vmatpush.msra.mxu0 0.0
    %638 = vmatpush.msra.mxu0 0.0
    %639 = vmatpush.msra.mxu0 0.0
    %640 = vmatpush.msra.mxu0 0.0
    %641 = vmatpush.msra.mxu0 0.0
    %642 = vmatpush.msra.mxu0 0.0
    %643 = vmatpush.msra.mxu0 0.0
    %644 = vmatpush.msra.mxu0 0.0
    %645 = vmatpush.msra.mxu0 0.0
    %646 = vmatpush.msra.mxu0 0.0
    %647 = vmatpush.msra.mxu0 0.0
    %648 = vmatpush.msra.mxu0 0.0
    %649 = vmatpush.msra.mxu0 %v618
    %650 = vmatpush.msra.mxu0 %v616
    %651 = vmatpush.msra.mxu0 %v614
    %652 = vmatpush.msra.mxu0 %v612
    %653 = vmatmul.f32.gmra.mxu0 %v635
    %v654 = vpop.f32.mrf.mxu0
    %v655 = vadd.f32 0.0, %v654
    %656 = vdwg.mxu0
    %657 = vmatpush.msra.mxu0 0.0
    %658 = vmatpush.msra.mxu0 0.0
    %659 = vmatpush.msra.mxu0 0.0
    %660 = vmatpush.msra.mxu0 0.0
    %661 = vmatpush.msra.mxu0 0.0
    %662 = vmatpush.msra.mxu0 0.0
    %663 = vmatpush.msra.mxu0 0.0
    %664 = vmatpush.msra.mxu0 0.0
    %665 = vmatpush.msra.mxu0 0.0
    %666 = vmatpush.msra.mxu0 0.0
    %667 = vmatpush.msra.mxu0 0.0
    %668 = vmatpush.msra.mxu0 0.0
    %669 = vmatpush.msra.mxu0 %v619
    %670 = vmatpush.msra.mxu0 %v617
    %671 = vmatpush.msra.mxu0 %v615
    %672 = vmatpush.msra.mxu0 %v613
    %673 = vmatmul.f32.gmra.mxu0 %v635
    %v674 = vpop.f32.mrf.mxu0
    %v675 = vadd.f32 0.0, %v674
    %676 = vdwg.mxu0
    %v677 = vadd.f32 %v609, %v655
    %v678 = vadd.f32 %v610, %v675
    %679 = vst [vmem:[#allocation2] sm:$0xff] %v677
    %680 = vst [vmem:[#allocation2 + $0x8] sm:$0xff] %v678
    // Predicated region
    $region62: #{tpu_custom_call.1} parent=1 // pred_check
      %p681 = pneg %p124
    $region63: #{tpu_custom_call.1} parent=1 // pred_check_branch
      %683 = sbr.rel (%p681) target = $region65
    $region64: #{tpu_custom_call.1} parent=1 // pred_region
      %v684 = vld [vmem:[#allocation2] sm:$0xff]
      %v685 = vld [vmem:[#allocation2 + $0x8] sm:$0xff]
      %v686 = vmul.f32 %v684, 0.125
      %v687 = vmul.f32 %v685, 0.125
      %v688 = vld [vmem:[%s5] sm:$0x3]
      %v690 = vperm.slane %v688, 0
      %v691 = vperm.slane %v688, 1
      %v694 = vadd.f32 %v686, %v690
      %v695 = vadd.f32 %v687, %v691
      %v696 = vmax.f32 %v694, 0.0
      %v697 = vmax.f32 %v695, 0.0
      %v698 = vld [vmem:[#allocation12] sm:$0xff]
      %v699 = vld [vmem:[#allocation12 + $0x8] sm:$0xff]
      %v700 = vld [vmem:[#allocation12 + $0x10] sm:$0xff]
      %v701 = vld [vmem:[#allocation12 + $0x18] sm:$0xff]
      %v702 = vld [vmem:[#allocation12 + $0x20] sm:$0xff]
      %v703 = vld [vmem:[#allocation12 + $0x28] sm:$0xff]
      %v704 = vld [vmem:[#allocation12 + $0x30] sm:$0xff]
      %v705 = vld [vmem:[#allocation12 + $0x38] sm:$0xff]
      %v706 = vld [vmem:[#allocation12 + $0x40] sm:$0xff]
      %v707 = vld [vmem:[#allocation12 + $0x48] sm:$0xff]
      %v708 = vld [vmem:[#allocation12 + $0x50] sm:$0xff]
      %v709 = vld [vmem:[#allocation12 + $0x58] sm:$0xff]
      %v710 = vld [vmem:[#allocation12 + $0x60] sm:$0xff]
      %v711 = vld [vmem:[#allocation12 + $0x68] sm:$0xff]
      %v712 = vld [vmem:[#allocation12 + $0x70] sm:$0xff]
      %v713 = vld [vmem:[#allocation12 + $0x78] sm:$0xff]
      %v714 = vld [vmem:[#allocation12 + $0x80] sm:$0xff]
      %v715 = vld [vmem:[#allocation12 + $0x88] sm:$0xff]
      %v716 = vld [vmem:[#allocation12 + $0x90] sm:$0xff]
      %v717 = vld [vmem:[#allocation12 + $0x98] sm:$0xff]
      %v718 = vld [vmem:[#allocation12 + $0xa0] sm:$0xff]
      %v719 = vld [vmem:[#allocation12 + $0xa8] sm:$0xff]
      %v720 = vld [vmem:[#allocation12 + $0xb0] sm:$0xff]
      %v721 = vld [vmem:[#allocation12 + $0xb8] sm:$0xff]
      %v722 = vld [vmem:[#allocation12 + $0xc0] sm:$0xff]
      %v723 = vld [vmem:[#allocation12 + $0xc8] sm:$0xff]
      %v724 = vld [vmem:[#allocation12 + $0xd0] sm:$0xff]
      %v725 = vld [vmem:[#allocation12 + $0xd8] sm:$0xff]
      %v726 = vld [vmem:[#allocation12 + $0xe0] sm:$0xff]
      %v727 = vld [vmem:[#allocation12 + $0xe8] sm:$0xff]
      %v728 = vld [vmem:[#allocation12 + $0xf0] sm:$0xff]
      %v729 = vld [vmem:[#allocation12 + $0xf8] sm:$0xff]
      %v730 = vld [vmem:[%s7] sm:$0x1]
      %v732 = vperm.slane %v730, 0
      %734 = vmatpush.msra.mxu0 %v713
      %735 = vmatpush.msra.mxu0 %v712
      %736 = vmatpush.msra.mxu0 %v711
      %737 = vmatpush.msra.mxu0 %v710
      %738 = vmatpush.msra.mxu0 %v709
      %739 = vmatpush.msra.mxu0 %v708
      %740 = vmatpush.msra.mxu0 %v707
      %741 = vmatpush.msra.mxu0 %v706
      %742 = vmatpush.msra.mxu0 %v705
      %743 = vmatpush.msra.mxu0 %v704
      %744 = vmatpush.msra.mxu0 %v703
      %745 = vmatpush.msra.mxu0 %v702
      %746 = vmatpush.msra.mxu0 %v701
      %747 = vmatpush.msra.mxu0 %v700
      %748 = vmatpush.msra.mxu0 %v699
      %749 = vmatpush.msra.mxu0 %v698
      %750 = vmatmul.f32.gmra.mxu0 %v696
      %v751 = vpop.f32.mrf.mxu0
      %v752 = vadd.f32 %v732, %v751
      %753 = vdwg.mxu0
      %754 = vmatpush.msra.mxu0 %v729
      %755 = vmatpush.msra.mxu0 %v728
      %756 = vmatpush.msra.mxu0 %v727
      %757 = vmatpush.msra.mxu0 %v726
      %758 = vmatpush.msra.mxu0 %v725
      %759 = vmatpush.msra.mxu0 %v724
      %760 = vmatpush.msra.mxu0 %v723
      %761 = vmatpush.msra.mxu0 %v722
      %762 = vmatpush.msra.mxu0 %v721
      %763 = vmatpush.msra.mxu0 %v720
      %764 = vmatpush.msra.mxu0 %v719
      %765 = vmatpush.msra.mxu0 %v718
      %766 = vmatpush.msra.mxu0 %v717
      %767 = vmatpush.msra.mxu0 %v716
      %768 = vmatpush.msra.mxu0 %v715
      %769 = vmatpush.msra.mxu0 %v714
      %770 = vmatmul.f32.gmra.mxu0 %v697
      %v771 = vpop.f32.mrf.mxu0
      %v772 = vadd.f32 %v752, %v771
      %773 = vdwg.mxu0
      %v774 = vmax.f32 %v772, 0.0
      %775 = vst [vmem:[#allocation14] sm:$0xff] %v774
    $region65: #{tpu_custom_call.1} parent=1 // pred_fallthru
      _
    // Predicated region
    $region66: #{tpu_custom_call.1} parent=1 // pred_check
      _
    $region67: #{tpu_custom_call.1} parent=1 // pred_check_branch
      %777 = sbr.rel (0) target = $region69
    $region68: #{tpu_custom_call.1} parent=1 // pred_region
      %779 = vsyncadd [#allocation5], 0
      %s781 = sshll.u32 [#allocation14], 4
      %s782 = int_to_ptr.vmem [resolvable:$true] %s781
      %s783 = sshll.u32 %s8, 4
      %s784 = int_to_ptr.hbm [resolvable:$true] %s783
      %786 = dma.vmem_to_hbm [thread:$0]  %s782, 128, %s784, [#allocation5]
    $region69: #{tpu_custom_call.1} parent=1 // pred_fallthru
      _
    // Predicated region
    $region70: #{tpu_custom_call.1} parent=1 // pred_check
      _
    $region71: #{tpu_custom_call.1} parent=1 // pred_check_branch
      %788 = sbr.rel (0) target = $region73
    $region72: #{tpu_custom_call.1} parent=1 // pred_region
      %790 = dma.done [#allocation5], 128
    $region73: #{tpu_custom_call.1} parent=1 // pred_fallthru
      _
    %791 = vsyncpa [#allocation4], 1
    %792 = vsyncpa [#allocation7], 1
    %793 = vsyncpa [#allocation10], 1
    %794 = vsyncpa [#allocation13], 1
    %795 = vsyncpa [#allocation5], 1

</llo_original>
